<compile_context>
chip_gen: v7x
topology: tpu7x:2x2x1
jax: 0.10.0
libtpu: 0.0.40
codegen_flags: <defaults>
</compile_context>

<pallas_src>
import functools
import math

import jax
import jax.numpy as jnp
from jax import lax
from jax.experimental import pallas as pl
from jax.experimental.pallas import tpu as pltpu

MXU_DTYPE = jnp.bfloat16  # MXU input dtype; accumulation is always f32.


def _round_up(x, m):
    return (x + m - 1) // m * m


def _clamp_vmem(est_bytes):
    # 2x double-buffer headroom, floor 8 MiB, cap 32 MiB (safe on v5e/v6e/v7x).
    return int(min(max(2 * est_bytes, 8 << 20), 32 << 20))


# --------------------------------------------------------------------------
# Kernel 1: feature transform  support = X @ W   (W fully resident)
# --------------------------------------------------------------------------
def _xw_kernel(x_ref, w_ref, out_ref):
    out_ref[...] = jnp.dot(
        x_ref[...], w_ref[...], preferred_element_type=jnp.float32
    ).astype(out_ref.dtype)


def feature_transform(x, w, *, tm):
    """x: (M, F) bf16, w: (F, H) bf16 -> (M, H) bf16, row-tiled."""
    M, F = x.shape
    H = w.shape[1]
    grid_m = M // tm
    vmem_est = 2 * (tm * F * 2 + F * H * 2 + tm * H * 2)
    cost = pl.CostEstimate(
        flops=2 * M * F * H,
        transcendentals=0,
        bytes_accessed=M * F * 2 + F * H * 2 * grid_m + M * H * 2,
    )
    return pl.pallas_call(
        _xw_kernel,
        out_shape=jax.ShapeDtypeStruct((M, H), MXU_DTYPE),
        grid=(grid_m,),
        in_specs=[
            pl.BlockSpec((tm, F), lambda i: (i, 0)),
            pl.BlockSpec((F, H), lambda i: (0, 0)),
        ],
        out_specs=pl.BlockSpec((tm, H), lambda i: (i, 0)),
        compiler_params=pltpu.CompilerParams(
            dimension_semantics=("parallel",),
            vmem_limit_bytes=_clamp_vmem(vmem_est),
        ),
        cost_estimate=cost,
    )(x, w)


# --------------------------------------------------------------------------
# Kernel 2: aggregation  out = epilogue(adj @ support + bias)
#   grid (row tiles, K tiles); f32 accumulator; epilogue fused at last K step.
# --------------------------------------------------------------------------
def _agg_kernel(adj_ref, s_ref, b_ref, out_ref, acc_ref, *, epilogue):
    k = pl.program_id(1)

    @pl.when(k == 0)
    def _():
        acc_ref[...] = jnp.zeros_like(acc_ref)

    acc_ref[...] += jnp.dot(
        adj_ref[...], s_ref[...], preferred_element_type=jnp.float32
    )

    @pl.when(k == pl.num_programs(1) - 1)
    def _():
        z = acc_ref[...] + b_ref[...]          # bias add in f32
        out_ref[...] = epilogue(z).astype(out_ref.dtype)


def _relu_epilogue(z):
    return jnp.maximum(z, 0.0)


def _log_softmax_epilogue(z, *, n_valid):
    # Mask padded class lanes out of the log-sum-exp.
    lane = lax.broadcasted_iota(jnp.int32, z.shape, 1)
    z = jnp.where(lane < n_valid, z, -1e30)
    m = jnp.max(z, axis=1, keepdims=True)               # XLU cross-lane reduce
    e = jnp.exp(z - m)                                   # EUP
    lse = jnp.log(jnp.sum(e, axis=1, keepdims=True))
    return (z - m) - lse


def aggregate(adj, support, bias, epilogue, out_dtype, *, tm, tk,
              transcendentals=0):
    M, K = adj.shape
    H = support.shape[1]
    grid = (M // tm, K // tk)
    out_bytes = jnp.dtype(out_dtype).itemsize
    vmem_est = (
        2 * tm * tk * 2        # adj tile (double-buffered)
        + 2 * tk * H * 2       # support tile
        + 2 * H * 4            # bias
        + 2 * tm * H * out_bytes  # out tile
        + tm * H * 4           # f32 accumulator scratch
    )
    cost = pl.CostEstimate(
        flops=2 * M * K * H,
        transcendentals=int(transcendentals),
        bytes_accessed=M * K * 2 + K * H * 2 * grid[0] + M * H * out_bytes,
    )
    kernel = functools.partial(_agg_kernel, epilogue=epilogue)
    return pl.pallas_call(
        kernel,
        out_shape=jax.ShapeDtypeStruct((M, H), out_dtype),
        grid=grid,
        in_specs=[
            pl.BlockSpec((tm, tk), lambda i, k: (i, k)),
            pl.BlockSpec((tk, H), lambda i, k: (k, 0)),
            pl.BlockSpec((1, H), lambda i, k: (0, 0)),
        ],
        out_specs=pl.BlockSpec((tm, H), lambda i, k: (i, 0)),
        scratch_shapes=[pltpu.VMEM((tm, H), jnp.float32)],
        compiler_params=pltpu.CompilerParams(
            dimension_semantics=("parallel", "arbitrary"),
            vmem_limit_bytes=_clamp_vmem(vmem_est),
        ),
        cost_estimate=cost,
    )(adj, support, bias)


# --------------------------------------------------------------------------
# Full GCN forward
# --------------------------------------------------------------------------
def gcn_forward(x, adj, w1, b1, w2, b2, *, tile=256):
    assert tile % 128 == 0
    N, nfeat = x.shape
    nhid = w1.shape[1]
    nclass = w2.shape[1]

    # Node-dim padding / tile choice (one tile size for rows and adj columns).
    if N >= tile:
        t = tile
        N_p = _round_up(N, t)
    else:
        N_p = _round_up(N, 16)     # bf16 sublane packing alignment
        t = N_p
    F_p = _round_up(nfeat, 128)
    H_p = _round_up(nhid, 128)
    C_p = _round_up(nclass, 128)

    f32 = jnp.float32
    pad2 = lambda a, r, c: jnp.pad(a, ((0, r - a.shape[0]), (0, c - a.shape[1])))

    x_p = pad2(x.astype(f32), N_p, F_p).astype(MXU_DTYPE)
    adj_p = pad2(adj.astype(f32), N_p, N_p).astype(MXU_DTYPE)
    w1_p = pad2(w1.astype(f32), F_p, H_p).astype(MXU_DTYPE)
    w2_p = pad2(w2.astype(f32), H_p, C_p).astype(MXU_DTYPE)
    b1_p = pad2(jnp.reshape(b1, (1, -1)).astype(f32), 1, H_p)
    b2_p = pad2(jnp.reshape(b2, (1, -1)).astype(f32), 1, C_p)

    # ----- Layer 1: h1 = relu(adj @ (x @ W1) + b1) -----
    s1 = feature_transform(x_p, w1_p, tm=t)
    h1 = aggregate(adj_p, s1, b1_p, _relu_epilogue, MXU_DTYPE, tm=t, tk=t)

    # ----- Dropout: identity (eval mode) -----
    # TODO(synk): training-mode dropout (PRNG mask via pltpu.prng_*) not implemented.

    # ----- Layer 2: log_softmax(adj @ (h1 @ W2) + b2) -----
    s2 = feature_transform(h1, w2_p, tm=t)
    out_p = aggregate(
        adj_p, s2, b2_p,
        functools.partial(_log_softmax_epilogue, n_valid=nclass),
        jnp.float32, tm=t, tk=t,
        transcendentals=N_p * C_p,
    )
    return out_p[:N, :nclass]


# --------------------------------------------------------------------------
# References
# --------------------------------------------------------------------------
def reference_forward_f32(x, adj, w1, b1, w2, b2):
    h1 = jnp.maximum(adj @ (x @ w1) + b1, 0.0)
    h2 = adj @ (h1 @ w2) + b2
    return jax.nn.log_softmax(h2, axis=1)


def reference_forward_mxu(x, adj, w1, b1, w2, b2, dtype=MXU_DTYPE):
    # Mirrors the kernel's bf16-MXU-input / f32-accumulate precision.
    c = lambda a: a.astype(dtype)
    dot = lambda a, b: jnp.dot(c(a), c(b), preferred_element_type=jnp.float32)
    s1 = dot(x, w1).astype(dtype)
    h1 = jnp.maximum(dot(adj, s1) + b1, 0.0).astype(dtype)
    s2 = dot(h1, w2).astype(dtype)
    h2 = dot(adj, s2) + b2
    return jax.nn.log_softmax(h2, axis=1)


if __name__ == "__main__":
    key = jax.random.PRNGKey(0)

    def make_problem(k, N, nfeat, nhid, nclass):
        kx, kadj, kw1, kb1, kw2, kb2 = jax.random.split(k, 6)
        x = jax.random.normal(kx, (N, nfeat), dtype=jnp.float32)
        # Symmetric, self-looped, row-normalized adjacency (pygcn preprocessing).
        a = (jax.random.uniform(kadj, (N, N)) > 0.7).astype(jnp.float32)
        a = jnp.maximum(a, a.T) + jnp.eye(N, dtype=jnp.float32)
        adj = a / jnp.sum(a, axis=1, keepdims=True)
        stdv1 = 1.0 / float(nhid) ** 0.5
        w1 = jax.random.uniform(kw1, (nfeat, nhid), minval=-stdv1, maxval=stdv1, dtype=jnp.float32)
        b1 = jax.random.uniform(kb1, (1, nhid), minval=-stdv1, maxval=stdv1, dtype=jnp.float32)
        stdv2 = 1.0 / float(nclass) ** 0.5
        w2 = jax.random.uniform(kw2, (nhid, nclass), minval=-stdv2, maxval=stdv2, dtype=jnp.float32)
        b2 = jax.random.uniform(kb2, (1, nclass), minval=-stdv2, maxval=stdv2, dtype=jnp.float32)
        return x, adj, w1, b1, w2, b2

    gcn = jax.jit(gcn_forward)
    k1, k2 = jax.random.split(key)

    # Test 1: small, single-tile path.
    args1 = make_problem(k1, N=16, nfeat=32, nhid=16, nclass=8)
    out1 = jax.block_until_ready(gcn(*args1))
    assert out1.shape == (16, 8)
    assert jnp.allclose(out1, reference_forward_mxu(*args1), atol=2e-3, rtol=2e-3), \
        "mismatch vs bf16-precision reference (test 1)"
    assert jnp.allclose(out1, reference_forward_f32(*args1), atol=6e-2, rtol=6e-2), \
        "mismatch vs f32 reference (test 1)"

    # Test 2: multi-tile grid (row tiles + K-reduction tiles), padding + class masking.
    args2 = make_problem(k2, N=600, nfeat=300, nhid=64, nclass=10)
    out2 = jax.block_until_ready(gcn(*args2))
    assert out2.shape == (600, 10)
    assert jnp.allclose(out2, reference_forward_mxu(*args2), atol=2e-3, rtol=2e-3), \
        "mismatch vs bf16-precision reference (test 2)"
    assert jnp.allclose(out2, reference_forward_f32(*args2), atol=1e-1, rtol=1e-1), \
        "mismatch vs f32 reference (test 2)"

    print("KERNEL_OK")
</pallas_src>

<mosaic_0001>
module attributes {stable_mosaic.version = 11 : i64} {
  func.func @_xw_kernel(%arg0: i32, %arg1: memref<16x128xbf16, #tpu.memory_space<vmem>>, %arg2: memref<128x128xbf16, #tpu.memory_space<vmem>>, %arg3: memref<16x128xbf16, #tpu.memory_space<vmem>>) attributes {dimension_semantics = [#tpu.dimension_semantics<parallel>], iteration_bounds = array<i64: 1>, scalar_prefetch = 0 : i64, scratch_operands = 0 : i64, tpu.core_type = #tpu.core_type<tc>, window_params = [{transform_indices = @transform_0, window_bounds = array<i64: 16, 128>}, {pipeline_mode = #tpu.pipeline_mode<synchronous>, transform_indices = @transform_1, window_bounds = array<i64: 128, 128>}, {transform_indices = @transform_2, window_bounds = array<i64: 16, 128>}]} {
    %c0 = arith.constant 0 : index
    %c0_0 = arith.constant 0 : index
    %0 = vector.load %arg1[%c0, %c0_0] : memref<16x128xbf16, #tpu.memory_space<vmem>>, vector<16x128xbf16>
    %c0_1 = arith.constant 0 : index
    %c0_2 = arith.constant 0 : index
    %1 = vector.load %arg2[%c0_1, %c0_2] : memref<128x128xbf16, #tpu.memory_space<vmem>>, vector<128x128xbf16>
    %cst = arith.constant dense<0.000000e+00> : vector<16x128xf32>
    %2 = tpu.matmul %0, %1, %cst {dimension_numbers = #tpu.dot_dimension_numbers<[1], [0], [0], [1], [0, 0, 1, 1], [], []>} : vector<16x128xbf16>, vector<128x128xbf16>, vector<16x128xf32> -> vector<16x128xf32>
    %3 = arith.truncf %2 : vector<16x128xf32> to vector<16x128xbf16>
    %c0_3 = arith.constant 0 : index
    %c0_4 = arith.constant 0 : index
    %4 = vector.load %arg3[%c0_3, %c0_4] : memref<16x128xbf16, #tpu.memory_space<vmem>>, vector<16x128xbf16>
    tpu.vector_store %arg3[%c0_3, %c0_4], %3 {strides = array<i32>} : memref<16x128xbf16, #tpu.memory_space<vmem>>, vector<16x128xbf16>,
    return
  }
  func.func @transform_0(%arg0: i32) -> (i32, i32) {
    %c0_i32 = arith.constant 0 : i32
    %c0_i32_0 = arith.constant 0 : i32
    return %arg0, %c0_i32 : i32, i32
  }
  func.func @transform_1(%arg0: i32) -> (i32, i32) {
    %c0_i32 = arith.constant 0 : i32
    %c0_i32_0 = arith.constant 0 : i32
    %c0_i32_1 = arith.constant 0 : i32
    return %c0_i32, %c0_i32_0 : i32, i32
  }
  func.func @transform_2(%arg0: i32) -> (i32, i32) {
    %c0_i32 = arith.constant 0 : i32
    %c0_i32_0 = arith.constant 0 : i32
    return %arg0, %c0_i32 : i32, i32
  }
}

module attributes {stable_mosaic.version = 11 : i64} {
  func.func @_agg_kernel(%arg0: i32, %arg1: i32, %arg2: memref<16x16xbf16, #tpu.memory_space<vmem>>, %arg3: memref<16x128xbf16, #tpu.memory_space<vmem>>, %arg4: memref<1x128xf32, #tpu.memory_space<vmem>>, %arg5: memref<16x128xbf16, #tpu.memory_space<vmem>>, %arg6: memref<16x128xf32, #tpu.memory_space<vmem>>) attributes {dimension_semantics = [#tpu.dimension_semantics<parallel>, #tpu.dimension_semantics<arbitrary>], iteration_bounds = array<i64: 1, 1>, scalar_prefetch = 0 : i64, scratch_operands = 1 : i64, tpu.core_type = #tpu.core_type<tc>, window_params = [{transform_indices = @transform_0, window_bounds = array<i64: 16, 16>}, {transform_indices = @transform_1, window_bounds = array<i64: 16, 128>}, {pipeline_mode = #tpu.pipeline_mode<synchronous>, transform_indices = @transform_2, window_bounds = array<i64: 1, 128>}, {transform_indices = @transform_3, window_bounds = array<i64: 16, 128>}]} {
    %c0_i32 = arith.constant 0 : i32
    %0 = arith.cmpi eq, %arg1, %c0_i32 : i32
    %1 = arith.extui %0 : i1 to i32
    %c0_i32_0 = arith.constant 0 : i32
    %2 = arith.cmpi ne, %1, %c0_i32_0 : i32
    scf.if %2 {
      %cst_10 = arith.constant 0.000000e+00 : f32
      %12 = vector.broadcast %cst_10 : f32 to vector<16x128xf32>
      %c0_11 = arith.constant 0 : index
      %c0_12 = arith.constant 0 : index
      %13 = vector.load %arg6[%c0_11, %c0_12] : memref<16x128xf32, #tpu.memory_space<vmem>>, vector<16x128xf32>
      tpu.vector_store %arg6[%c0_11, %c0_12], %12 {strides = array<i32>} : memref<16x128xf32, #tpu.memory_space<vmem>>, vector<16x128xf32>,
    } else {
    }
    %c0 = arith.constant 0 : index
    %c0_1 = arith.constant 0 : index
    %3 = vector.load %arg6[%c0, %c0_1] : memref<16x128xf32, #tpu.memory_space<vmem>>, vector<16x128xf32>
    %c0_2 = arith.constant 0 : index
    %c0_3 = arith.constant 0 : index
    %4 = vector.load %arg2[%c0_2, %c0_3] : memref<16x16xbf16, #tpu.memory_space<vmem>>, vector<16x16xbf16>
    %c0_4 = arith.constant 0 : index
    %c0_5 = arith.constant 0 : index
    %5 = vector.load %arg3[%c0_4, %c0_5] : memref<16x128xbf16, #tpu.memory_space<vmem>>, vector<16x128xbf16>
    %cst = arith.constant dense<0.000000e+00> : vector<16x128xf32>
    %6 = tpu.matmul %4, %5, %cst {dimension_numbers = #tpu.dot_dimension_numbers<[1], [0], [0], [1], [0, 0, 1, 1], [], []>} : vector<16x16xbf16>, vector<16x128xbf16>, vector<16x128xf32> -> vector<16x128xf32>
    %7 = arith.addf %3, %6 : vector<16x128xf32>
    %c0_6 = arith.constant 0 : index
    %c0_7 = arith.constant 0 : index
    %8 = vector.load %arg6[%c0_6, %c0_7] : memref<16x128xf32, #tpu.memory_space<vmem>>, vector<16x128xf32>
    tpu.vector_store %arg6[%c0_6, %c0_7], %7 {strides = array<i32>} : memref<16x128xf32, #tpu.memory_space<vmem>>, vector<16x128xf32>,
    %c0_i32_8 = arith.constant 0 : i32
    %9 = arith.cmpi eq, %arg1, %c0_i32_8 : i32
    %10 = arith.extui %9 : i1 to i32
    %c0_i32_9 = arith.constant 0 : i32
    %11 = arith.cmpi ne, %10, %c0_i32_9 : i32
    scf.if %11 {
      %c0_10 = arith.constant 0 : index
      %c0_11 = arith.constant 0 : index
      %12 = vector.load %arg6[%c0_10, %c0_11] : memref<16x128xf32, #tpu.memory_space<vmem>>, vector<16x128xf32>
      %c0_12 = arith.constant 0 : index
      %c0_13 = arith.constant 0 : index
      %13 = vector.load %arg4[%c0_12, %c0_13] : memref<1x128xf32, #tpu.memory_space<vmem>>, vector<1x128xf32>
      %14 = vector.broadcast %13 : vector<1x128xf32> to vector<16x128xf32>
      %15 = arith.addf %12, %14 : vector<16x128xf32>
      %cst_14 = arith.constant 0.000000e+00 : f32
      %16 = vector.broadcast %cst_14 : f32 to vector<16x128xf32>
      %17 = arith.maximumf %15, %16 : vector<16x128xf32>
      %18 = arith.truncf %17 : vector<16x128xf32> to vector<16x128xbf16>
      %c0_15 = arith.constant 0 : index
      %c0_16 = arith.constant 0 : index
      %19 = vector.load %arg5[%c0_15, %c0_16] : memref<16x128xbf16, #tpu.memory_space<vmem>>, vector<16x128xbf16>
      tpu.vector_store %arg5[%c0_15, %c0_16], %18 {strides = array<i32>} : memref<16x128xbf16, #tpu.memory_space<vmem>>, vector<16x128xbf16>,
    } else {
    }
    return
  }
  func.func @transform_0(%arg0: i32, %arg1: i32) -> (i32, i32) {
    %c0_i32 = arith.constant 0 : i32
    return %arg0, %arg1 : i32, i32
  }
  func.func @transform_1(%arg0: i32, %arg1: i32) -> (i32, i32) {
    %c0_i32 = arith.constant 0 : i32
    %c0_i32_0 = arith.constant 0 : i32
    return %arg1, %c0_i32 : i32, i32
  }
  func.func @transform_2(%arg0: i32, %arg1: i32) -> (i32, i32) {
    %c0_i32 = arith.constant 0 : i32
    %c0_i32_0 = arith.constant 0 : i32
    %c0_i32_1 = arith.constant 0 : i32
    return %c0_i32, %c0_i32_0 : i32, i32
  }
  func.func @transform_3(%arg0: i32, %arg1: i32) -> (i32, i32) {
    %c0_i32 = arith.constant 0 : i32
    %c0_i32_0 = arith.constant 0 : i32
    return %arg0, %c0_i32 : i32, i32
  }
}

module attributes {stable_mosaic.version = 11 : i64} {
  func.func @_agg_kernel(%arg0: i32, %arg1: i32, %arg2: memref<16x16xbf16, #tpu.memory_space<vmem>>, %arg3: memref<16x128xbf16, #tpu.memory_space<vmem>>, %arg4: memref<1x128xf32, #tpu.memory_space<vmem>>, %arg5: memref<16x128xf32, #tpu.memory_space<vmem>>, %arg6: memref<16x128xf32, #tpu.memory_space<vmem>>) attributes {dimension_semantics = [#tpu.dimension_semantics<parallel>, #tpu.dimension_semantics<arbitrary>], iteration_bounds = array<i64: 1, 1>, scalar_prefetch = 0 : i64, scratch_operands = 1 : i64, tpu.core_type = #tpu.core_type<tc>, window_params = [{transform_indices = @transform_0, window_bounds = array<i64: 16, 16>}, {transform_indices = @transform_1, window_bounds = array<i64: 16, 128>}, {pipeline_mode = #tpu.pipeline_mode<synchronous>, transform_indices = @transform_2, window_bounds = array<i64: 1, 128>}, {transform_indices = @transform_3, window_bounds = array<i64: 16, 128>}]} {
    %c0_i32 = arith.constant 0 : i32
    %0 = arith.cmpi eq, %arg1, %c0_i32 : i32
    %1 = arith.extui %0 : i1 to i32
    %c0_i32_0 = arith.constant 0 : i32
    %2 = arith.cmpi ne, %1, %c0_i32_0 : i32
    scf.if %2 {
      %cst_10 = arith.constant 0.000000e+00 : f32
      %12 = vector.broadcast %cst_10 : f32 to vector<16x128xf32>
      %c0_11 = arith.constant 0 : index
      %c0_12 = arith.constant 0 : index
      %13 = vector.load %arg6[%c0_11, %c0_12] : memref<16x128xf32, #tpu.memory_space<vmem>>, vector<16x128xf32>
      tpu.vector_store %arg6[%c0_11, %c0_12], %12 {strides = array<i32>} : memref<16x128xf32, #tpu.memory_space<vmem>>, vector<16x128xf32>,
    } else {
    }
    %c0 = arith.constant 0 : index
    %c0_1 = arith.constant 0 : index
    %3 = vector.load %arg6[%c0, %c0_1] : memref<16x128xf32, #tpu.memory_space<vmem>>, vector<16x128xf32>
    %c0_2 = arith.constant 0 : index
    %c0_3 = arith.constant 0 : index
    %4 = vector.load %arg2[%c0_2, %c0_3] : memref<16x16xbf16, #tpu.memory_space<vmem>>, vector<16x16xbf16>
    %c0_4 = arith.constant 0 : index
    %c0_5 = arith.constant 0 : index
    %5 = vector.load %arg3[%c0_4, %c0_5] : memref<16x128xbf16, #tpu.memory_space<vmem>>, vector<16x128xbf16>
    %cst = arith.constant dense<0.000000e+00> : vector<16x128xf32>
    %6 = tpu.matmul %4, %5, %cst {dimension_numbers = #tpu.dot_dimension_numbers<[1], [0], [0], [1], [0, 0, 1, 1], [], []>} : vector<16x16xbf16>, vector<16x128xbf16>, vector<16x128xf32> -> vector<16x128xf32>
    %7 = arith.addf %3, %6 : vector<16x128xf32>
    %c0_6 = arith.constant 0 : index
    %c0_7 = arith.constant 0 : index
    %8 = vector.load %arg6[%c0_6, %c0_7] : memref<16x128xf32, #tpu.memory_space<vmem>>, vector<16x128xf32>
    tpu.vector_store %arg6[%c0_6, %c0_7], %7 {strides = array<i32>} : memref<16x128xf32, #tpu.memory_space<vmem>>, vector<16x128xf32>,
    %c0_i32_8 = arith.constant 0 : i32
    %9 = arith.cmpi eq, %arg1, %c0_i32_8 : i32
    %10 = arith.extui %9 : i1 to i32
    %c0_i32_9 = arith.constant 0 : i32
    %11 = arith.cmpi ne, %10, %c0_i32_9 : i32
    scf.if %11 {
      %c0_10 = arith.constant 0 : index
      %c0_11 = arith.constant 0 : index
      %12 = vector.load %arg6[%c0_10, %c0_11] : memref<16x128xf32, #tpu.memory_space<vmem>>, vector<16x128xf32>
      %c0_12 = arith.constant 0 : index
      %c0_13 = arith.constant 0 : index
      %13 = vector.load %arg4[%c0_12, %c0_13] : memref<1x128xf32, #tpu.memory_space<vmem>>, vector<1x128xf32>
      %14 = vector.broadcast %13 : vector<1x128xf32> to vector<16x128xf32>
      %15 = arith.addf %12, %14 : vector<16x128xf32>
      %16 = tpu.iota {dimensions = array<i32: 1>} : vector<16x128xi32>
      %c8_i32 = arith.constant 8 : i32
      %17 = vector.broadcast %c8_i32 : i32 to vector<16x128xi32>
      %18 = arith.cmpi slt, %16, %17 : vector<16x128xi32>
      %cst_14 = arith.constant -1.000000e+30 : f32
      %19 = vector.broadcast %cst_14 : f32 to vector<16x128xf32>
      %20 = arith.select %18, %15, %19 : vector<16x128xi1>, vector<16x128xf32>
      %cst_15 = arith.constant dense<0xFF800000> : vector<16xf32>
      %21 = vector.multi_reduction <maximumf>, %20, %cst_15 [1] : vector<16x128xf32> to vector<16xf32>
      %22 = vector.shape_cast %21 : vector<16xf32> to vector<16x1xf32>
      %23 = vector.broadcast %22 : vector<16x1xf32> to vector<16x128xf32>
      %24 = arith.subf %20, %23 : vector<16x128xf32>
      %25 = math.exp %24 : vector<16x128xf32>
      %cst_16 = arith.constant dense<0.000000e+00> : vector<16xf32>
      %26 = vector.multi_reduction <add>, %25, %cst_16 [1] : vector<16x128xf32> to vector<16xf32>
      %27 = vector.shape_cast %26 : vector<16xf32> to vector<16x1xf32>
      %28 = math.log %27 : vector<16x1xf32>
      %29 = vector.broadcast %22 : vector<16x1xf32> to vector<16x128xf32>
      %30 = arith.subf %20, %29 : vector<16x128xf32>
      %31 = vector.broadcast %28 : vector<16x1xf32> to vector<16x128xf32>
      %32 = arith.subf %30, %31 : vector<16x128xf32>
      %c0_17 = arith.constant 0 : index
      %c0_18 = arith.constant 0 : index
      %33 = vector.load %arg5[%c0_17, %c0_18] : memref<16x128xf32, #tpu.memory_space<vmem>>, vector<16x128xf32>
      tpu.vector_store %arg5[%c0_17, %c0_18], %32 {strides = array<i32>} : memref<16x128xf32, #tpu.memory_space<vmem>>, vector<16x128xf32>,
    } else {
    }
    return
  }
  func.func @transform_0(%arg0: i32, %arg1: i32) -> (i32, i32) {
    %c0_i32 = arith.constant 0 : i32
    return %arg0, %arg1 : i32, i32
  }
  func.func @transform_1(%arg0: i32, %arg1: i32) -> (i32, i32) {
    %c0_i32 = arith.constant 0 : i32
    %c0_i32_0 = arith.constant 0 : i32
    return %arg1, %c0_i32 : i32, i32
  }
  func.func @transform_2(%arg0: i32, %arg1: i32) -> (i32, i32) {
    %c0_i32 = arith.constant 0 : i32
    %c0_i32_0 = arith.constant 0 : i32
    %c0_i32_1 = arith.constant 0 : i32
    return %c0_i32, %c0_i32_0 : i32, i32
  }
  func.func @transform_3(%arg0: i32, %arg1: i32) -> (i32, i32) {
    %c0_i32 = arith.constant 0 : i32
    %c0_i32_0 = arith.constant 0 : i32
    return %arg0, %c0_i32 : i32, i32
  }
}

</mosaic_0001>

<llo_original>
// kernel: gcn_forward.4
$region0: #{gcn_forward.4}
  #allocation0 [shape = 'u32[]', space=smem, size = 0x4, offset = 0x4, fixed_abs, tag = 'smem constant byte address 0x4 - core index']
  #allocation1 [shape = 'u32[144,128]{1,0:T(1,128)}', space=vmem, size = 0x12000, scoped, tag = 'internal scratch']
  %s0 = inlined_call_operand.vmem [shape: bf16[16,128], index: 0, kind: input, shape index: {}]
  %s1 = inlined_call_operand.vmem [shape: bf16[128,128], index: 1, kind: input, shape index: {}]
  %s2 = inlined_call_operand.vmem [shape: bf16[16,128], index: 2, kind: output, shape index: {}]
  %s3 = sld [smem:[#allocation0]]
  $region18: #{gcn_forward.4} parent=0
    _
  %s5 = ssub.s32 1, %s3
  %s6 = scalar_select 0, %s5, %s3
  // Predicated region
  $region2: #{gcn_forward.4} parent=0 // pred_check
    _
  $region3: #{gcn_forward.4} parent=0 // pred_check_branch
    %8 = sbr.rel (0) target = $region5
  $region4: #{gcn_forward.4} parent=0 // pred_region
    _
  $region5: #{gcn_forward.4} parent=0 // pred_fallthru
    _
  // Predicated region
  $region6: #{gcn_forward.4} parent=0 // pred_check
    _
  $region7: #{gcn_forward.4} parent=0 // pred_check_branch
    %10 = sbr.rel (0) target = $region9
  $region8: #{gcn_forward.4} parent=0 // pred_region
    _
  $region9: #{gcn_forward.4} parent=0 // pred_fallthru
    _
  %v12 = vld [vmem:[%s0] sm:$0xf]
  %v13 = vld [vmem:[%s0 + $0x4] sm:$0xf]
  %v14 = vld [vmem:[%s1] sm:$0xf]
  %v15 = vld [vmem:[%s1 + $0x4] sm:$0xf]
  %v16 = vld [vmem:[%s1 + $0x8] sm:$0xf]
  %v17 = vld [vmem:[%s1 + $0xc] sm:$0xf]
  %v18 = vld [vmem:[%s1 + $0x10] sm:$0xf]
  %v19 = vld [vmem:[%s1 + $0x14] sm:$0xf]
  %v20 = vld [vmem:[%s1 + $0x18] sm:$0xf]
  %v21 = vld [vmem:[%s1 + $0x1c] sm:$0xf]
  %v22 = vld [vmem:[%s1 + $0x20] sm:$0xf]
  %v23 = vld [vmem:[%s1 + $0x24] sm:$0xf]
  %v24 = vld [vmem:[%s1 + $0x28] sm:$0xf]
  %v25 = vld [vmem:[%s1 + $0x2c] sm:$0xf]
  %v26 = vld [vmem:[%s1 + $0x30] sm:$0xf]
  %v27 = vld [vmem:[%s1 + $0x34] sm:$0xf]
  %v28 = vld [vmem:[%s1 + $0x38] sm:$0xf]
  %v29 = vld [vmem:[%s1 + $0x3c] sm:$0xf]
  %v32 = vunpack.c.l.b16 %v12
  %v33 = vunpack.c.l.b16 %v13
  %v34 = vpack.c.b16 %v33, %v32
  %v52 = vunpack.c.l.b16 %v14
  %v53 = vunpack.c.l.b16 %v15
  %v54 = vunpack.c.l.b16 %v16
  %v55 = vunpack.c.l.b16 %v17
  %v56 = vunpack.c.l.b16 %v18
  %v57 = vunpack.c.l.b16 %v19
  %v58 = vunpack.c.l.b16 %v20
  %v59 = vunpack.c.l.b16 %v21
  %v60 = vunpack.c.l.b16 %v22
  %v61 = vunpack.c.l.b16 %v23
  %v62 = vunpack.c.l.b16 %v24
  %v63 = vunpack.c.l.b16 %v25
  %v64 = vunpack.c.l.b16 %v26
  %v65 = vunpack.c.l.b16 %v27
  %v66 = vunpack.c.l.b16 %v28
  %v67 = vunpack.c.l.b16 %v29
  %v68 = vpack.c.b16 %v53, %v52
  %v69 = vpack.c.b16 %v55, %v54
  %v70 = vpack.c.b16 %v57, %v56
  %v71 = vpack.c.b16 %v59, %v58
  %v72 = vpack.c.b16 %v61, %v60
  %v73 = vpack.c.b16 %v63, %v62
  %v74 = vpack.c.b16 %v65, %v64
  %v75 = vpack.c.b16 %v67, %v66
  %84 = vmatprep.subr.bf16.mxu0 0
  %85 = vmatpush1.bf16.msra.mxu0 %v68
  %86 = vmatprep.subr.bf16.mxu0 0
  %87 = vmatpush1.bf16.msra.mxu0 %v69
  %88 = vmatprep.subr.bf16.mxu0 0
  %89 = vmatpush1.bf16.msra.mxu0 %v70
  %90 = vmatprep.subr.bf16.mxu0 0
  %91 = vmatpush1.bf16.msra.mxu0 %v71
  %92 = vmatprep.subr.bf16.mxu0 0
  %93 = vmatpush1.bf16.msra.mxu0 %v72
  %94 = vmatprep.subr.bf16.mxu0 0
  %95 = vmatpush1.bf16.msra.mxu0 %v73
  %96 = vmatprep.subr.bf16.mxu0 0
  %97 = vmatpush1.bf16.msra.mxu0 %v74
  %98 = vmatprep.subr.bf16.mxu0 0
  %99 = vmatpush1.bf16.msra.mxu0 %v75
  %100 = vmatprep.subr.bf16.mxu0 0
  %101 = vmatpush1.bf16.msra.mxu0 0
  %102 = vmatprep.subr.bf16.mxu0 0
  %103 = vmatpush1.bf16.msra.mxu0 0
  %104 = vmatprep.subr.bf16.mxu0 0
  %105 = vmatpush1.bf16.msra.mxu0 0
  %106 = vmatprep.subr.bf16.mxu0 0
  %107 = vmatpush1.bf16.msra.mxu0 0
  %108 = vmatprep.subr.bf16.mxu0 0
  %109 = vmatpush1.bf16.msra.mxu0 0
  %110 = vmatprep.subr.bf16.mxu0 0
  %111 = vmatpush1.bf16.msra.mxu0 0
  %112 = vmatprep.subr.bf16.mxu0 0
  %113 = vmatpush1.bf16.msra.mxu0 0
  %114 = vmatprep.subr.bf16.mxu0 0
  %115 = vmatpush1.bf16.msra.mxu0 0
  %116 = vmatprep.mubr.bf16.mxu0 0
  %117 = vmatmul.mubr.bf16.gmra.mrb[0].mxu0 %v34
  %v118 = vpop.f32.mrb[0].mxu0
  %v119 = vadd.f32 0.0, %v118
  %v120 = vpop.f32.mrb[0].mxu0
  %v121 = vpop.f32.mrb[0].mxu0
  %v122 = vadd.f32 0.0, %v121
  %v123 = vpop.f32.mrb[0].mxu0
  %124 = vdwg.mxu0
  %v125 = vpack.c.bf16 %v122, %v119
  %v127 = vunpack.c.l.b16 %v125
  %v128 = vunpack.c.h.b16 %v125
  %v129 = vpack.c.b16 %v127, %v127
  %v130 = vpack.c.b16 %v128, %v128
  %133 = vst [vmem:[%s2] sm:$0xf] %v129
  %134 = vst [vmem:[%s2 + $0x4] sm:$0xf] %v130
  // Predicated region
  $region10: #{gcn_forward.4} parent=0 // pred_check
    _
  $region11: #{gcn_forward.4} parent=0 // pred_check_branch
    %136 = sbr.rel (0) target = $region13
  $region12: #{gcn_forward.4} parent=0 // pred_region
    _
  $region13: #{gcn_forward.4} parent=0 // pred_fallthru
    _
  // Predicated region
  $region14: #{gcn_forward.4} parent=0 // pred_check
    _
  $region15: #{gcn_forward.4} parent=0 // pred_check_branch
    %138 = sbr.rel (0) target = $region17
  $region16: #{gcn_forward.4} parent=0 // pred_region
    _
  $region17: #{gcn_forward.4} parent=0 // pred_fallthru
    _

// kernel: gcn_forward.5
$region0: #{gcn_forward.5}
  #allocation0 [shape = 'u32[]', space=smem, size = 0x4, offset = 0x4, fixed_abs, tag = 'smem constant byte address 0x4 - core index']
  #allocation1 [shape = 'u32[144,128]{1,0:T(1,128)}', space=vmem, size = 0x12000, scoped, tag = 'internal scratch']
  #allocation2 [shape = 'f32[16,128]{1,0:T(8,128)}', space=vmem, size = 0x2000, scoped, tag = 'scratch operand']
  %s0 = inlined_call_operand.vmem [shape: bf16[16,16], index: 0, kind: input, shape index: {}]
  %s1 = inlined_call_operand.vmem [shape: bf16[16,128], index: 1, kind: input, shape index: {}]
  %s2 = inlined_call_operand.vmem [shape: f32[1,128], index: 2, kind: input, shape index: {}]
  %s3 = inlined_call_operand.vmem [shape: bf16[16,128], index: 3, kind: output, shape index: {}]
  %s4 = sld [smem:[#allocation0]]
  $region30: #{gcn_forward.5} parent=0
    _
  %s6 = ssub.s32 1, %s4
  %s7 = scalar_select 0, %s6, %s4
  // Predicated region
  $region2: #{gcn_forward.5} parent=0 // pred_check
    _
  $region3: #{gcn_forward.5} parent=0 // pred_check_branch
    %9 = sbr.rel (0) target = $region5
  $region4: #{gcn_forward.5} parent=0 // pred_region
    _
  $region5: #{gcn_forward.5} parent=0 // pred_fallthru
    _
  // Predicated region
  $region6: #{gcn_forward.5} parent=0 // pred_check
    _
  $region7: #{gcn_forward.5} parent=0 // pred_check_branch
    %11 = sbr.rel (0) target = $region9
  $region8: #{gcn_forward.5} parent=0 // pred_region
    _
  $region9: #{gcn_forward.5} parent=0 // pred_fallthru
    _
  // Predicated region
  $region10: #{gcn_forward.5} parent=0 // pred_check
    _
  $region11: #{gcn_forward.5} parent=0 // pred_check_branch
    %13 = sbr.rel (0) target = $region13
  $region12: #{gcn_forward.5} parent=0 // pred_region
    _
  $region13: #{gcn_forward.5} parent=0 // pred_fallthru
    _
  %p15 = scmp.eq.s32.totalorder 0, 0
  // Predicated region
  $region14: #{gcn_forward.5} parent=0 // pred_check
    %p16 = pneg %p15
  $region15: #{gcn_forward.5} parent=0 // pred_check_branch
    %18 = sbr.rel (%p16) target = $region17
  $region16: #{gcn_forward.5} parent=0 // pred_region
    %19 = vst [vmem:[#allocation2] sm:$0xff] 0.0
    %20 = vst [vmem:[#allocation2 + $0x8] sm:$0xff] 0.0
  $region17: #{gcn_forward.5} parent=0 // pred_fallthru
    _
  %v21 = vld [vmem:[#allocation2] sm:$0xff]
  %v22 = vld [vmem:[#allocation2 + $0x8] sm:$0xff]
  %v23 = vld [vmem:[%s0] sm:$0xf]
  %v24 = vld [vmem:[%s0 + $0x4] sm:$0xf]
  %v25 = vld [vmem:[%s1] sm:$0xf]
  %v26 = vld [vmem:[%s1 + $0x4] sm:$0xf]
  %v29 = vunpack.c.l.b16 %v23
  %v30 = vunpack.c.l.b16 %v24
  %v31 = vpack.c.b16 %v30, %v29
  %v34 = vunpack.c.l.b16 %v25
  %v35 = vunpack.c.l.b16 %v26
  %v36 = vpack.c.b16 %v35, %v34
  %vm38 = vcmask 130048
  %v40 = vsel %vm38, %v31, 0
  %42 = vmatprep.subr.bf16.mxu0 0
  %43 = vmatpush1.bf16.msra.mxu0 %v36
  %44 = vmatprep.subr.bf16.mxu0 0
  %45 = vmatpush1.bf16.msra.mxu0 0
  %46 = vmatprep.subr.bf16.mxu0 0
  %47 = vmatpush1.bf16.msra.mxu0 0
  %48 = vmatprep.subr.bf16.mxu0 0
  %49 = vmatpush1.bf16.msra.mxu0 0
  %50 = vmatprep.subr.bf16.mxu0 0
  %51 = vmatpush1.bf16.msra.mxu0 0
  %52 = vmatprep.subr.bf16.mxu0 0
  %53 = vmatpush1.bf16.msra.mxu0 0
  %54 = vmatprep.subr.bf16.mxu0 0
  %55 = vmatpush1.bf16.msra.mxu0 0
  %56 = vmatprep.subr.bf16.mxu0 0
  %57 = vmatpush1.bf16.msra.mxu0 0
  %58 = vmatprep.subr.bf16.mxu0 0
  %59 = vmatpush1.bf16.msra.mxu0 0
  %60 = vmatprep.subr.bf16.mxu0 0
  %61 = vmatpush1.bf16.msra.mxu0 0
  %62 = vmatprep.subr.bf16.mxu0 0
  %63 = vmatpush1.bf16.msra.mxu0 0
  %64 = vmatprep.subr.bf16.mxu0 0
  %65 = vmatpush1.bf16.msra.mxu0 0
  %66 = vmatprep.subr.bf16.mxu0 0
  %67 = vmatpush1.bf16.msra.mxu0 0
  %68 = vmatprep.subr.bf16.mxu0 0
  %69 = vmatpush1.bf16.msra.mxu0 0
  %70 = vmatprep.subr.bf16.mxu0 0
  %71 = vmatpush1.bf16.msra.mxu0 0
  %72 = vmatprep.subr.bf16.mxu0 0
  %73 = vmatpush1.bf16.msra.mxu0 0
  %74 = vmatprep.mubr.bf16.mxu0 0
  %75 = vmatmul.mubr.bf16.gmra.mrb[0].mxu0 %v40
  %v76 = vpop.f32.mrb[0].mxu0
  %v77 = vadd.f32 0.0, %v76
  %v78 = vpop.f32.mrb[0].mxu0
  %v79 = vpop.f32.mrb[0].mxu0
  %v80 = vadd.f32 0.0, %v79
  %v81 = vpop.f32.mrb[0].mxu0
  %82 = vdwg.mxu0
  %v83 = vadd.f32 %v21, %v77
  %v84 = vadd.f32 %v22, %v80
  %85 = vst [vmem:[#allocation2] sm:$0xff] %v83
  %86 = vst [vmem:[#allocation2 + $0x8] sm:$0xff] %v84
  // Predicated region
  $region18: #{gcn_forward.5} parent=0 // pred_check
    %p87 = pneg %p15
  $region19: #{gcn_forward.5} parent=0 // pred_check_branch
    %89 = sbr.rel (%p87) target = $region21
  $region20: #{gcn_forward.5} parent=0 // pred_region
    %v90 = vld [vmem:[#allocation2] sm:$0xff]
    %v91 = vld [vmem:[#allocation2 + $0x8] sm:$0xff]
    %v92 = vld [vmem:[%s2] sm:$0x1]
    %v94 = vlaneseq
    %v95 = vshrl.u32 %v94, 7
    %v96 = vsub.s32 0, %v95
    %v97 = vrot.slane %v92, %v96
    %v99 = vadd.f32 %v90, %v97
    %v100 = vadd.f32 %v91, %v97
    %v101 = vmax.f32 %v99, 0.0
    %v102 = vmax.f32 %v100, 0.0
    %v103 = vpack.c.bf16 %v102, %v101
    %v105 = vunpack.c.l.b16 %v103
    %v106 = vunpack.c.h.b16 %v103
    %v107 = vpack.c.b16 %v105, %v105
    %v108 = vpack.c.b16 %v106, %v106
    %111 = vst [vmem:[%s3] sm:$0xf] %v107
    %112 = vst [vmem:[%s3 + $0x4] sm:$0xf] %v108
  $region21: #{gcn_forward.5} parent=0 // pred_fallthru
    _
  // Predicated region
  $region22: #{gcn_forward.5} parent=0 // pred_check
    _
  $region23: #{gcn_forward.5} parent=0 // pred_check_branch
    %114 = sbr.rel (0) target = $region25
  $region24: #{gcn_forward.5} parent=0 // pred_region
    _
  $region25: #{gcn_forward.5} parent=0 // pred_fallthru
    _
  // Predicated region
  $region26: #{gcn_forward.5} parent=0 // pred_check
    _
  $region27: #{gcn_forward.5} parent=0 // pred_check_branch
    %116 = sbr.rel (0) target = $region29
  $region28: #{gcn_forward.5} parent=0 // pred_region
    _
  $region29: #{gcn_forward.5} parent=0 // pred_fallthru
    _

// kernel: gcn_forward.7
$region0: #{gcn_forward.7}
  #allocation0 [shape = 'u32[]', space=smem, size = 0x4, offset = 0x4, fixed_abs, tag = 'smem constant byte address 0x4 - core index']
  #allocation1 [shape = 'u32[144,128]{1,0:T(1,128)}', space=vmem, size = 0x12000, scoped, tag = 'internal scratch']
  #allocation2 [shape = 'f32[16,128]{1,0:T(8,128)}', space=vmem, size = 0x2000, scoped, tag = 'scratch operand']
  %s0 = inlined_call_operand.vmem [shape: bf16[16,16], index: 0, kind: input, shape index: {}]
  %s1 = inlined_call_operand.vmem [shape: bf16[16,128], index: 1, kind: input, shape index: {}]
  %s2 = inlined_call_operand.vmem [shape: f32[1,128], index: 2, kind: input, shape index: {}]
  %s3 = inlined_call_operand.vmem [shape: f32[16,128], index: 3, kind: output, shape index: {}]
  %s4 = sld [smem:[#allocation0]]
  $region30: #{gcn_forward.7} parent=0
    _
  %s6 = ssub.s32 1, %s4
  %s7 = scalar_select 0, %s6, %s4
  // Predicated region
  $region2: #{gcn_forward.7} parent=0 // pred_check
    _
  $region3: #{gcn_forward.7} parent=0 // pred_check_branch
    %9 = sbr.rel (0) target = $region5
  $region4: #{gcn_forward.7} parent=0 // pred_region
    _
  $region5: #{gcn_forward.7} parent=0 // pred_fallthru
    _
  // Predicated region
  $region6: #{gcn_forward.7} parent=0 // pred_check
    _
  $region7: #{gcn_forward.7} parent=0 // pred_check_branch
    %11 = sbr.rel (0) target = $region9
  $region8: #{gcn_forward.7} parent=0 // pred_region
    _
  $region9: #{gcn_forward.7} parent=0 // pred_fallthru
    _
  // Predicated region
  $region10: #{gcn_forward.7} parent=0 // pred_check
    _
  $region11: #{gcn_forward.7} parent=0 // pred_check_branch
    %13 = sbr.rel (0) target = $region13
  $region12: #{gcn_forward.7} parent=0 // pred_region
    _
  $region13: #{gcn_forward.7} parent=0 // pred_fallthru
    _
  %p15 = scmp.eq.s32.totalorder 0, 0
  // Predicated region
  $region14: #{gcn_forward.7} parent=0 // pred_check
    %p16 = pneg %p15
  $region15: #{gcn_forward.7} parent=0 // pred_check_branch
    %18 = sbr.rel (%p16) target = $region17
  $region16: #{gcn_forward.7} parent=0 // pred_region
    %19 = vst [vmem:[#allocation2] sm:$0xff] 0.0
    %20 = vst [vmem:[#allocation2 + $0x8] sm:$0xff] 0.0
  $region17: #{gcn_forward.7} parent=0 // pred_fallthru
    _
  %v21 = vld [vmem:[#allocation2] sm:$0xff]
  %v22 = vld [vmem:[#allocation2 + $0x8] sm:$0xff]
  %v23 = vld [vmem:[%s0] sm:$0xf]
  %v24 = vld [vmem:[%s0 + $0x4] sm:$0xf]
  %v25 = vld [vmem:[%s1] sm:$0xf]
  %v26 = vld [vmem:[%s1 + $0x4] sm:$0xf]
  %v29 = vunpack.c.l.b16 %v23
  %v30 = vunpack.c.l.b16 %v24
  %v31 = vpack.c.b16 %v30, %v29
  %v34 = vunpack.c.l.b16 %v25
  %v35 = vunpack.c.l.b16 %v26
  %v36 = vpack.c.b16 %v35, %v34
  %vm38 = vcmask 130048
  %v40 = vsel %vm38, %v31, 0
  %42 = vmatprep.subr.bf16.mxu0 0
  %43 = vmatpush1.bf16.msra.mxu0 %v36
  %44 = vmatprep.subr.bf16.mxu0 0
  %45 = vmatpush1.bf16.msra.mxu0 0
  %46 = vmatprep.subr.bf16.mxu0 0
  %47 = vmatpush1.bf16.msra.mxu0 0
  %48 = vmatprep.subr.bf16.mxu0 0
  %49 = vmatpush1.bf16.msra.mxu0 0
  %50 = vmatprep.subr.bf16.mxu0 0
  %51 = vmatpush1.bf16.msra.mxu0 0
  %52 = vmatprep.subr.bf16.mxu0 0
  %53 = vmatpush1.bf16.msra.mxu0 0
  %54 = vmatprep.subr.bf16.mxu0 0
  %55 = vmatpush1.bf16.msra.mxu0 0
  %56 = vmatprep.subr.bf16.mxu0 0
  %57 = vmatpush1.bf16.msra.mxu0 0
  %58 = vmatprep.subr.bf16.mxu0 0
  %59 = vmatpush1.bf16.msra.mxu0 0
  %60 = vmatprep.subr.bf16.mxu0 0
  %61 = vmatpush1.bf16.msra.mxu0 0
  %62 = vmatprep.subr.bf16.mxu0 0
  %63 = vmatpush1.bf16.msra.mxu0 0
  %64 = vmatprep.subr.bf16.mxu0 0
  %65 = vmatpush1.bf16.msra.mxu0 0
  %66 = vmatprep.subr.bf16.mxu0 0
  %67 = vmatpush1.bf16.msra.mxu0 0
  %68 = vmatprep.subr.bf16.mxu0 0
  %69 = vmatpush1.bf16.msra.mxu0 0
  %70 = vmatprep.subr.bf16.mxu0 0
  %71 = vmatpush1.bf16.msra.mxu0 0
  %72 = vmatprep.subr.bf16.mxu0 0
  %73 = vmatpush1.bf16.msra.mxu0 0
  %74 = vmatprep.mubr.bf16.mxu0 0
  %75 = vmatmul.mubr.bf16.gmra.mrb[0].mxu0 %v40
  %v76 = vpop.f32.mrb[0].mxu0
  %v77 = vadd.f32 0.0, %v76
  %v78 = vpop.f32.mrb[0].mxu0
  %v79 = vpop.f32.mrb[0].mxu0
  %v80 = vadd.f32 0.0, %v79
  %v81 = vpop.f32.mrb[0].mxu0
  %82 = vdwg.mxu0
  %v83 = vadd.f32 %v21, %v77
  %v84 = vadd.f32 %v22, %v80
  %85 = vst [vmem:[#allocation2] sm:$0xff] %v83
  %86 = vst [vmem:[#allocation2 + $0x8] sm:$0xff] %v84
  // Predicated region
  $region18: #{gcn_forward.7} parent=0 // pred_check
    %p87 = pneg %p15
  $region19: #{gcn_forward.7} parent=0 // pred_check_branch
    %89 = sbr.rel (%p87) target = $region21
  $region20: #{gcn_forward.7} parent=0 // pred_region
    %v90 = vld [vmem:[#allocation2] sm:$0xff]
    %v91 = vld [vmem:[#allocation2 + $0x8] sm:$0xff]
    %v92 = vld [vmem:[%s2] sm:$0x1]
    %v94 = vlaneseq
    %v95 = vshrl.u32 %v94, 7
    %v96 = vsub.s32 0, %v95
    %v97 = vrot.slane %v92, %v96
    %v99 = vadd.f32 %v90, %v97
    %v100 = vadd.f32 %v91, %v97
    %v101 = vlaneseq
    %v102 = vand.u32 %v101, 127
    %vm103 = vcmp.lt.s32.totalorder %v102, 8
    %v104 = vsel %vm103, %v99, -1e+30
    %v105 = vsel %vm103, %v100, -1e+30
    %106 = vmax.xlane.f32.xlu0 %v104
    %v107 = vpop.xlane.xlu0 %106
    %108 = vmax.xlane.f32.xlu0 %v105
    %v109 = vpop.xlane.xlu0 %108
    %v110 = vsub.f32 %v104, %v107
    %v111 = vsub.f32 %v105, %v109
    %v112 = vmul.f32 %v110, 1.442695
    %v113 = vpow.pop %v112
    %v114 = vmul.f32 %v111, 1.442695
    %v115 = vpow.pop %v114
    %116 = vadd.xlane.f32.xlu0 %v113
    %v117 = vpop.xlane.xlu0 %116
    %118 = vadd.xlane.f32.xlu0 %v115
    %v119 = vpop.xlane.xlu0 %118
    %v120 = vlog2.pop %v117
    %v121 = vmul.f32 %v120, 0.6931472
    %v122 = vlog2.pop %v119
    %v123 = vmul.f32 %v122, 0.6931472
    %v124 = vsub.f32 %v110, %v121
    %v125 = vsub.f32 %v111, %v123
    %126 = vst [vmem:[%s3] sm:$0xff] %v124
    %127 = vst [vmem:[%s3 + $0x8] sm:$0xff] %v125
  $region21: #{gcn_forward.7} parent=0 // pred_fallthru
    _
  // Predicated region
  $region22: #{gcn_forward.7} parent=0 // pred_check
    _
  $region23: #{gcn_forward.7} parent=0 // pred_check_branch
    %129 = sbr.rel (0) target = $region25
  $region24: #{gcn_forward.7} parent=0 // pred_region
    _
  $region25: #{gcn_forward.7} parent=0 // pred_fallthru
    _
  // Predicated region
  $region26: #{gcn_forward.7} parent=0 // pred_check
    _
  $region27: #{gcn_forward.7} parent=0 // pred_check_branch
    %131 = sbr.rel (0) target = $region29
  $region28: #{gcn_forward.7} parent=0 // pred_region
    _
  $region29: #{gcn_forward.7} parent=0 // pred_fallthru
    _

</llo_original>
